<compile_context>
chip_gen: v7x
topology: tpu7x:2x2x1
jax: 0.10.0
libtpu: 0.0.40
codegen_flags: <defaults>
</compile_context>

<pallas_src>
import functools

import jax
import jax.numpy as jnp
from jax.experimental import pallas as pl
from jax.experimental.pallas import tpu as pltpu

# ---- model hyperparameters (small, consistent with the module) ----
BATCH = 8
OBS_DIM = 16
ACTION_DIM = 4
HIDDEN = 32
LAYER_SIZE = 3          # 1 input Linear + (LAYER_SIZE-1) shared hidden Linears
MAX_ACTION = 1.0

assert OBS_DIM <= HIDDEN, "packing scheme pads the first-layer weight to HIDDEN rows"
assert ACTION_DIM <= HIDDEN, "packing scheme pads the head weight to HIDDEN output lanes"


def _round_up(x, m):
    return (x + m - 1) // m * m


def policy_kernel(state_ref, w_ref, b_ref, out_ref, *,
                  num_hidden, is_continuous, max_action, action_dim, obs_dim):
    # Packed parameters (resident in VMEM across all grid steps):
    #   w_ref: (3, HIDDEN, HIDDEN) bf16  [0]=first Linear (real rows [:obs_dim])
    #                                    [1]=shared hidden Linear
    #                                    [2]=mean head (real cols [:action_dim])
    #   b_ref: (3, 1, HIDDEN) f32        matching biases (head bias zero-padded)
    bb = state_ref.shape[0]

    w0 = w_ref[0, :obs_dim, :]       # (obs_dim, H) static sublane-aligned slice
    wh = w_ref[1]                    # (H, H) loaded once, reused for every hidden layer
    wm = w_ref[2]                    # (H, H), zero-padded cols beyond action_dim
    b0 = b_ref[0]                    # (1, H)
    bm = b_ref[2]
    # hoist the (1,H)->(bb,H) broadcast of the shared hidden bias out of the loop
    bh_full = jnp.broadcast_to(b_ref[1], (bb, HIDDEN))

    # first policy layer: bf16 operands, f32 accumulate
    x = state_ref[...].astype(jnp.bfloat16)
    h = jnp.dot(x, w0, preferred_element_type=jnp.float32) + b0

    # (layer_size - 1) repetitions of the SHARED [ReLU, Linear(H, H)] block
    for _ in range(num_hidden):
        a = jnp.maximum(h, 0.0).astype(jnp.bfloat16)   # ReLU in f32, cast at MXU input
        h = jnp.dot(a, wh, preferred_element_type=jnp.float32) + bh_full

    # mean head (padded to HIDDEN output lanes, real logits in the first cols)
    logits = jnp.dot(h.astype(jnp.bfloat16), wm,
                     preferred_element_type=jnp.float32) + bm
    logits = logits[:, :action_dim]

    if is_continuous:
        out = jnp.tanh(logits) * max_action
    else:
        m = jnp.max(logits, axis=1, keepdims=True)
        e = jnp.exp(logits - m)
        denom = jnp.sum(e, axis=1, keepdims=True)
        out = e * pl.reciprocal(denom, approx=True)    # divide on the idle EUP slot

    out_ref[...] = out.astype(out_ref.dtype)


def _choose_block(B, block_b):
    """Pick the batch tile size (multiple of 8, capped at block_b rows)."""
    B8 = _round_up(B, 8)
    if B8 <= 16:
        return B8                      # tiny demo batches: one grid step
    # v7x has 2 TensorCores and "parallel" grid axes shard across them: make
    # sure there are at least 2 grid steps for non-trivial batches, while
    # capping the tile (per-step overhead is ~0.35us, so keep tiles big).
    bb = _round_up(pl.cdiv(B8, 2), 8)
    return min(bb, block_b)


def policy_forward(state, w_packed, b_packed, *,
                   is_continuous=False, max_action=MAX_ACTION, block_b=8192):
    """state: (B, OBS_DIM) f32.  w_packed: (3, HIDDEN, HIDDEN) bf16.  b_packed: (3, 1, HIDDEN) f32."""
    B = state.shape[0]
    state = state.astype(jnp.float32)

    bb = _choose_block(B, block_b)
    Bp = _round_up(_round_up(B, 8), bb)
    if Bp != B:
        state = jnp.pad(state, ((0, Bp - B), (0, 0)))

    kernel = functools.partial(
        policy_kernel,
        num_hidden=LAYER_SIZE - 1,
        is_continuous=is_continuous,
        max_action=max_action,
        action_dim=ACTION_DIM,
        obs_dim=OBS_DIM,
    )

    flops = 2 * Bp * (OBS_DIM * HIDDEN
                      + (LAYER_SIZE - 1) * HIDDEN * HIDDEN
                      + HIDDEN * HIDDEN)
    transcendentals = Bp * ACTION_DIM            # exp (discrete) or tanh (continuous)
    bytes_accessed = (Bp * OBS_DIM * 4           # state in
                      + Bp * ACTION_DIM * 4      # action_mean out
                      + 3 * HIDDEN * HIDDEN * 2  # bf16 weight slab
                      + 3 * 1 * HIDDEN * 4)      # f32 bias slab

    out = pl.pallas_call(
        kernel,
        out_shape=jax.ShapeDtypeStruct((Bp, ACTION_DIM), jnp.float32),
        grid=(Bp // bb,),
        in_specs=[
            pl.BlockSpec((bb, OBS_DIM), lambda i: (i, 0)),            # state block
            pl.BlockSpec((3, HIDDEN, HIDDEN), lambda i: (0, 0, 0)),   # weights (resident)
            pl.BlockSpec((3, 1, HIDDEN), lambda i: (0, 0, 0)),        # biases (resident)
        ],
        out_specs=pl.BlockSpec((bb, ACTION_DIM), lambda i: (i, 0)),
        compiler_params=pltpu.CompilerParams(dimension_semantics=("parallel",)),
        cost_estimate=pl.CostEstimate(flops=flops,
                                      transcendentals=transcendentals,
                                      bytes_accessed=bytes_accessed),
    )(state, w_packed, b_packed)

    return out[:B]


# ---------------- host-side parameter handling ----------------

def init_params(key):
    """torch.nn.Linear default init: U(-1/sqrt(fan_in), 1/sqrt(fan_in)).
    Weights stored transposed, i.e. (in_dim, out_dim)."""
    ks = jax.random.split(key, 6)

    def lin(kw, kb, fan_in, fan_out):
        bound = 1.0 / (fan_in ** 0.5)
        w = jax.random.uniform(kw, (fan_in, fan_out), jnp.float32, -bound, bound)
        b = jax.random.uniform(kb, (fan_out,), jnp.float32, -bound, bound)
        return w, b

    w0, b0 = lin(ks[0], ks[1], OBS_DIM, HIDDEN)      # policy[0]
    wh, bh = lin(ks[2], ks[3], HIDDEN, HIDDEN)       # shared net_block Linear
    wm, bm = lin(ks[4], ks[5], HIDDEN, ACTION_DIM)   # mean head
    return dict(w0=w0, b0=b0, wh=wh, bh=bh, wm=wm, bm=bm)


def pack_params(p):
    """Pack the three Linear layers into one bf16 weight slab and one f32 bias slab."""
    W = jnp.zeros((3, HIDDEN, HIDDEN), jnp.float32)
    W = W.at[0, :OBS_DIM, :].set(p["w0"])
    W = W.at[1].set(p["wh"])
    W = W.at[2, :, :ACTION_DIM].set(p["wm"])
    W = W.astype(jnp.bfloat16)                       # MXU operands are bf16

    b = jnp.zeros((3, 1, HIDDEN), jnp.float32)
    b = b.at[0, 0, :].set(p["b0"])
    b = b.at[1, 0, :].set(p["bh"])
    b = b.at[2, 0, :ACTION_DIM].set(p["bm"])
    return W, b


def reference_forward(state, p, *, is_continuous=False, max_action=MAX_ACTION):
    h = state @ p["w0"] + p["b0"]
    for _ in range(LAYER_SIZE - 1):
        h = jnp.maximum(h, 0.0) @ p["wh"] + p["bh"]
    logits = h @ p["wm"] + p["bm"]
    if is_continuous:
        return jnp.tanh(logits) * max_action
    return jax.nn.softmax(logits, axis=1)


if __name__ == "__main__":
    key = jax.random.PRNGKey(0)
    kp, kx, kx2 = jax.random.split(key, 3)
    params = init_params(kp)
    state = jax.random.normal(kx, (BATCH, OBS_DIM), jnp.float32)

    W, b = pack_params(params)

    # discrete branch (softmax action probabilities == Categorical params)
    out = policy_forward(state, W, b, is_continuous=False)
    jax.block_until_ready(out)
    ref = reference_forward(state, params, is_continuous=False)
    assert out.shape == (BATCH, ACTION_DIM)
    # bf16 MXU operands -> loosened tolerance vs the f32 reference
    assert jnp.allclose(out, ref, atol=5e-2, rtol=5e-2)
    assert jnp.allclose(jnp.sum(out, axis=1), 1.0, atol=1e-2)

    # continuous branch (tanh(mean) * max_action == Normal mean)
    out_c = policy_forward(state, W, b, is_continuous=True, max_action=MAX_ACTION)
    jax.block_until_ready(out_c)
    ref_c = reference_forward(state, params, is_continuous=True, max_action=MAX_ACTION)
    assert jnp.allclose(out_c, ref_c, atol=5e-2, rtol=5e-2)

    # larger rollout batch: exercises the multi-step "parallel" grid path
    big_state = jax.random.normal(kx2, (2048, OBS_DIM), jnp.float32)
    out_big = policy_forward(big_state, W, b, is_continuous=False)
    jax.block_until_ready(out_big)
    ref_big = reference_forward(big_state, params, is_continuous=False)
    assert out_big.shape == (2048, ACTION_DIM)
    assert jnp.allclose(out_big, ref_big, atol=5e-2, rtol=5e-2)

    print("KERNEL_OK")
</pallas_src>

<mosaic_0001>
module attributes {stable_mosaic.version = 11 : i64} {
  func.func @policy_kernel(%arg0: i32, %arg1: memref<8x16xf32, #tpu.memory_space<vmem>>, %arg2: memref<3x32x32xbf16, #tpu.memory_space<vmem>>, %arg3: memref<3x1x32xf32, #tpu.memory_space<vmem>>, %arg4: memref<8x4xf32, #tpu.memory_space<vmem>>) attributes {dimension_semantics = [#tpu.dimension_semantics<parallel>], iteration_bounds = array<i64: 1>, scalar_prefetch = 0 : i64, scratch_operands = 0 : i64, tpu.core_type = #tpu.core_type<tc>, window_params = [{transform_indices = @transform_0, window_bounds = array<i64: 8, 16>}, {pipeline_mode = #tpu.pipeline_mode<synchronous>, transform_indices = @transform_1, window_bounds = array<i64: 3, 32, 32>}, {pipeline_mode = #tpu.pipeline_mode<synchronous>, transform_indices = @transform_2, window_bounds = array<i64: 3, 1, 32>}, {transform_indices = @transform_3, window_bounds = array<i64: 8, 4>}]} {
    %c0 = arith.constant 0 : index
    %c0_0 = arith.constant 0 : index
    %c0_1 = arith.constant 0 : index
    %0 = vector.load %arg2[%c0, %c0_0, %c0_1] : memref<3x32x32xbf16, #tpu.memory_space<vmem>>, vector<1x16x32xbf16>
    %1 = vector.shape_cast %0 : vector<1x16x32xbf16> to vector<16x32xbf16>
    %c1 = arith.constant 1 : index
    %c0_2 = arith.constant 0 : index
    %c0_3 = arith.constant 0 : index
    %2 = vector.load %arg2[%c1, %c0_2, %c0_3] : memref<3x32x32xbf16, #tpu.memory_space<vmem>>, vector<1x32x32xbf16>
    %3 = vector.shape_cast %2 : vector<1x32x32xbf16> to vector<32x32xbf16>
    %c2 = arith.constant 2 : index
    %c0_4 = arith.constant 0 : index
    %c0_5 = arith.constant 0 : index
    %4 = vector.load %arg2[%c2, %c0_4, %c0_5] : memref<3x32x32xbf16, #tpu.memory_space<vmem>>, vector<1x32x32xbf16>
    %5 = vector.shape_cast %4 : vector<1x32x32xbf16> to vector<32x32xbf16>
    %c0_6 = arith.constant 0 : index
    %c0_7 = arith.constant 0 : index
    %c0_8 = arith.constant 0 : index
    %6 = vector.load %arg3[%c0_6, %c0_7, %c0_8] : memref<3x1x32xf32, #tpu.memory_space<vmem>>, vector<1x1x32xf32>
    %7 = vector.shape_cast %6 : vector<1x1x32xf32> to vector<1x32xf32>
    %c2_9 = arith.constant 2 : index
    %c0_10 = arith.constant 0 : index
    %c0_11 = arith.constant 0 : index
    %8 = vector.load %arg3[%c2_9, %c0_10, %c0_11] : memref<3x1x32xf32, #tpu.memory_space<vmem>>, vector<1x1x32xf32>
    %9 = vector.shape_cast %8 : vector<1x1x32xf32> to vector<1x32xf32>
    %c1_12 = arith.constant 1 : index
    %c0_13 = arith.constant 0 : index
    %c0_14 = arith.constant 0 : index
    %10 = vector.load %arg3[%c1_12, %c0_13, %c0_14] : memref<3x1x32xf32, #tpu.memory_space<vmem>>, vector<1x1x32xf32>
    %11 = vector.shape_cast %10 : vector<1x1x32xf32> to vector<1x32xf32>
    %12 = vector.shape_cast %11 : vector<1x32xf32> to vector<1x32xf32>
    %13 = vector.broadcast %12 : vector<1x32xf32> to vector<8x32xf32>
    %c0_15 = arith.constant 0 : index
    %c0_16 = arith.constant 0 : index
    %14 = vector.load %arg1[%c0_15, %c0_16] : memref<8x16xf32, #tpu.memory_space<vmem>>, vector<8x16xf32>
    %15 = arith.truncf %14 : vector<8x16xf32> to vector<8x16xbf16>
    %cst = arith.constant dense<0.000000e+00> : vector<8x32xf32>
    %16 = tpu.matmul %15, %1, %cst {dimension_numbers = #tpu.dot_dimension_numbers<[1], [0], [0], [1], [0, 0, 1, 1], [], []>} : vector<8x16xbf16>, vector<16x32xbf16>, vector<8x32xf32> -> vector<8x32xf32>
    %17 = vector.broadcast %7 : vector<1x32xf32> to vector<8x32xf32>
    %18 = arith.addf %16, %17 : vector<8x32xf32>
    %cst_17 = arith.constant 0.000000e+00 : f32
    %19 = vector.broadcast %cst_17 : f32 to vector<8x32xf32>
    %20 = arith.maximumf %18, %19 : vector<8x32xf32>
    %21 = arith.truncf %20 : vector<8x32xf32> to vector<8x32xbf16>
    %cst_18 = arith.constant dense<0.000000e+00> : vector<8x32xf32>
    %22 = tpu.matmul %21, %3, %cst_18 {dimension_numbers = #tpu.dot_dimension_numbers<[1], [0], [0], [1], [0, 0, 1, 1], [], []>} : vector<8x32xbf16>, vector<32x32xbf16>, vector<8x32xf32> -> vector<8x32xf32>
    %23 = arith.addf %22, %13 : vector<8x32xf32>
    %cst_19 = arith.constant 0.000000e+00 : f32
    %24 = vector.broadcast %cst_19 : f32 to vector<8x32xf32>
    %25 = arith.maximumf %23, %24 : vector<8x32xf32>
    %26 = arith.truncf %25 : vector<8x32xf32> to vector<8x32xbf16>
    %cst_20 = arith.constant dense<0.000000e+00> : vector<8x32xf32>
    %27 = tpu.matmul %26, %3, %cst_20 {dimension_numbers = #tpu.dot_dimension_numbers<[1], [0], [0], [1], [0, 0, 1, 1], [], []>} : vector<8x32xbf16>, vector<32x32xbf16>, vector<8x32xf32> -> vector<8x32xf32>
    %28 = arith.addf %27, %13 : vector<8x32xf32>
    %29 = arith.truncf %28 : vector<8x32xf32> to vector<8x32xbf16>
    %cst_21 = arith.constant dense<0.000000e+00> : vector<8x32xf32>
    %30 = tpu.matmul %29, %5, %cst_21 {dimension_numbers = #tpu.dot_dimension_numbers<[1], [0], [0], [1], [0, 0, 1, 1], [], []>} : vector<8x32xbf16>, vector<32x32xbf16>, vector<8x32xf32> -> vector<8x32xf32>
    %31 = vector.broadcast %9 : vector<1x32xf32> to vector<8x32xf32>
    %32 = arith.addf %30, %31 : vector<8x32xf32>
    %33 = vector.extract_strided_slice %32 {offsets = [0, 0], sizes = [8, 4], strides = [1, 1]} : vector<8x32xf32> to vector<8x4xf32>
    %cst_22 = arith.constant dense<0xFF800000> : vector<8xf32>
    %34 = vector.multi_reduction <maximumf>, %33, %cst_22 [1] : vector<8x4xf32> to vector<8xf32>
    %35 = vector.shape_cast %34 : vector<8xf32> to vector<8x1xf32>
    %36 = vector.broadcast %35 : vector<8x1xf32> to vector<8x4xf32>
    %37 = arith.subf %33, %36 : vector<8x4xf32>
    %38 = math.exp %37 : vector<8x4xf32>
    %cst_23 = arith.constant dense<0.000000e+00> : vector<8xf32>
    %39 = vector.multi_reduction <add>, %38, %cst_23 [1] : vector<8x4xf32> to vector<8xf32>
    %40 = vector.shape_cast %39 : vector<8xf32> to vector<8x1xf32>
    %41 = tpu.reciprocal %40 {approx = true} : vector<8x1xf32> -> vector<8x1xf32>
    %42 = vector.broadcast %41 : vector<8x1xf32> to vector<8x4xf32>
    %43 = arith.mulf %38, %42 : vector<8x4xf32>
    %c0_24 = arith.constant 0 : index
    %c0_25 = arith.constant 0 : index
    %44 = vector.load %arg4[%c0_24, %c0_25] : memref<8x4xf32, #tpu.memory_space<vmem>>, vector<8x4xf32>
    tpu.vector_store %arg4[%c0_24, %c0_25], %43 {strides = array<i32>} : memref<8x4xf32, #tpu.memory_space<vmem>>, vector<8x4xf32>,
    return
  }
  func.func @transform_0(%arg0: i32) -> (i32, i32) {
    %c0_i32 = arith.constant 0 : i32
    %c0_i32_0 = arith.constant 0 : i32
    return %arg0, %c0_i32 : i32, i32
  }
  func.func @transform_1(%arg0: i32) -> (i32, i32, i32) {
    %c0_i32 = arith.constant 0 : i32
    %c0_i32_0 = arith.constant 0 : i32
    %c0_i32_1 = arith.constant 0 : i32
    %c0_i32_2 = arith.constant 0 : i32
    return %c0_i32, %c0_i32_0, %c0_i32_1 : i32, i32, i32
  }
  func.func @transform_2(%arg0: i32) -> (i32, i32, i32) {
    %c0_i32 = arith.constant 0 : i32
    %c0_i32_0 = arith.constant 0 : i32
    %c0_i32_1 = arith.constant 0 : i32
    %c0_i32_2 = arith.constant 0 : i32
    return %c0_i32, %c0_i32_0, %c0_i32_1 : i32, i32, i32
  }
  func.func @transform_3(%arg0: i32) -> (i32, i32) {
    %c0_i32 = arith.constant 0 : i32
    %c0_i32_0 = arith.constant 0 : i32
    return %arg0, %c0_i32 : i32, i32
  }
}

</mosaic_0001>

<llo_original>
// kernel: tpu_custom_call.1
$region0: #{tpu_custom_call.1}
  #allocation0 [shape = 'u32[]', space=smem, size = 0x4, offset = 0x4, fixed_abs, tag = 'smem constant byte address 0x4 - core index']
  #allocation1 [shape = 'u32[144,128]{1,0:T(1,128)}', space=vmem, size = 0x12000, scoped, tag = 'internal scratch']
  %s0 = inlined_call_operand.hbm [shape: f32[8,16], index: 0, kind: input, shape index: {}]
  %s1 = inlined_call_operand.hbm [shape: bf16[3,32,32], index: 1, kind: input, shape index: {}]
  %s2 = inlined_call_operand.vmem [shape: f32[3,1,32], index: 2, kind: input, shape index: {}]
  %s3 = inlined_call_operand.vmem [shape: f32[8,4], index: 3, kind: output, shape index: {}]
  %s4 = sld [smem:[#allocation0]]
  $region30: #{tpu_custom_call.1} parent=0
    _
  %s6 = ssub.s32 1, %s4
  %s7 = scalar_select 0, %s6, %s4
  $region1: #{tpu_custom_call.1} parent=0
    #allocation2 [shape = 'u8[4096]{0}', space=vmem, size = 0x1000, scoped, tag = 'input window, operand 0, single buffered']
    #allocation3 [shape = 's32[1]{0}', space=sflag, size = 0x4, scoped, tag = 'scoped memory for tpu_custom_call.1']
    #allocation4 [shape = 'u8[24576]{0}', space=vmem, size = 0x6000, scoped, tag = 'input window, operand 1, single buffered']
    #allocation5 [shape = 's32[1]{0}', space=sflag, size = 0x4, scoped, tag = 'scoped memory for tpu_custom_call.1']
    %8 = vsyncpa [#allocation3], 0
    %9 = vsyncpa [#allocation5], 0
    // Predicated region
    $region2: #{tpu_custom_call.1} parent=1 // pred_check
      _
    $region3: #{tpu_custom_call.1} parent=1 // pred_check_branch
      %11 = sbr.rel (0) target = $region5
    $region4: #{tpu_custom_call.1} parent=1 // pred_region
      %s13 = ssub.s32 128, 128
      %14 = vsyncadd [#allocation3], %s13
      %s16 = sshll.u32 [#allocation2], 4
      %s17 = int_to_ptr.vmem [resolvable:$true] %s16
      %19 = dma.hbm_to_vmem [thread:$0]  %s0, 128, %s17, [#allocation3]
    $region5: #{tpu_custom_call.1} parent=1 // pred_fallthru
      _
    // Predicated region
    $region6: #{tpu_custom_call.1} parent=1 // pred_check
      _
    $region7: #{tpu_custom_call.1} parent=1 // pred_check_branch
      %21 = sbr.rel (0) target = $region9
    $region8: #{tpu_custom_call.1} parent=1 // pred_region
      %s23 = ssub.s32 768, 768
      %24 = vsyncadd [#allocation5], %s23
      %s25 = sshll.u32 [#allocation4], 4
      %s26 = int_to_ptr.vmem [resolvable:$true] %s25
      %31 = dma.hbm_to_vmem [thread:$0]  %s1, 768, %s26, [#allocation5], 64, 64, 4
    $region9: #{tpu_custom_call.1} parent=1 // pred_fallthru
      _
    // Predicated region
    $region10: #{tpu_custom_call.1} parent=1 // pred_check
      _
    $region11: #{tpu_custom_call.1} parent=1 // pred_check_branch
      %33 = sbr.rel (0) target = $region13
    $region12: #{tpu_custom_call.1} parent=1 // pred_region
      _
    $region13: #{tpu_custom_call.1} parent=1 // pred_fallthru
      _
    // Predicated region
    $region14: #{tpu_custom_call.1} parent=1 // pred_check
      _
    $region15: #{tpu_custom_call.1} parent=1 // pred_check_branch
      %35 = sbr.rel (0) target = $region17
    $region16: #{tpu_custom_call.1} parent=1 // pred_region
      %36 = dma.done [#allocation3], 128
    $region17: #{tpu_custom_call.1} parent=1 // pred_fallthru
      _
    // Predicated region
    $region18: #{tpu_custom_call.1} parent=1 // pred_check
      _
    $region19: #{tpu_custom_call.1} parent=1 // pred_check_branch
      %38 = sbr.rel (0) target = $region21
    $region20: #{tpu_custom_call.1} parent=1 // pred_region
      %39 = dma.done [#allocation5], 768
    $region21: #{tpu_custom_call.1} parent=1 // pred_fallthru
      _
    %v41 = vld [vmem:[#allocation4] sm:$0xf]
    %v42 = vld [vmem:[#allocation4 + $0x4] sm:$0xf]
    %s43 = scalar_lea.vmem [#allocation4], 16
    %v44 = vld [vmem:[%s43] sm:$0xf]
    %v45 = vld [vmem:[%s43 + $0x4] sm:$0xf]
    %v46 = vld [vmem:[%s43 + $0x8] sm:$0xf]
    %v47 = vld [vmem:[%s43 + $0xc] sm:$0xf]
    %s48 = scalar_lea.vmem [#allocation4], 32
    %v49 = vld [vmem:[%s48] sm:$0xf]
    %v50 = vld [vmem:[%s48 + $0x4] sm:$0xf]
    %v51 = vld [vmem:[%s48 + $0x8] sm:$0xf]
    %v52 = vld [vmem:[%s48 + $0xc] sm:$0xf]
    %v53 = vld [vmem:[%s2] sm:$0x1]
    %s54 = scalar_lea.vmem %s2, 2
    %v55 = vld [vmem:[%s54] sm:$0x1]
    %s56 = scalar_lea.vmem %s2, 1
    %v57 = vld [vmem:[%s56] sm:$0x1]
    %v59 = vlaneseq
    %v60 = vshrl.u32 %v59, 7
    %v61 = vsub.s32 0, %v60
    %v62 = vrot.slane %v57, %v61
    %v64 = vld [vmem:[#allocation2] sm:$0xff]
    %v65 = vpack.c.bf16 %v64, %v64
    %v67 = vlaneseq
    %v68 = vshrl.u32 %v67, 7
    %v69 = vsub.s32 0, %v68
    %v70 = vrot.slane %v53, %v69
    %v74 = vunpack.c.l.b16 %v41
    %v75 = vunpack.c.l.b16 %v42
    %v76 = vpack.c.b16 %v75, %v74
    %vm78 = vcmask 130048
    %v80 = vsel %vm78, %v65, 0
    %82 = vmatprep.subr.bf16.mxu0 0
    %83 = vmatpush1.bf16.msra.mxu0 %v76
    %84 = vmatprep.subr.bf16.mxu0 0
    %85 = vmatpush1.bf16.msra.mxu0 0
    %86 = vmatprep.subr.bf16.mxu0 0
    %87 = vmatpush1.bf16.msra.mxu0 0
    %88 = vmatprep.subr.bf16.mxu0 0
    %89 = vmatpush1.bf16.msra.mxu0 0
    %90 = vmatprep.subr.bf16.mxu0 0
    %91 = vmatpush1.bf16.msra.mxu0 0
    %92 = vmatprep.subr.bf16.mxu0 0
    %93 = vmatpush1.bf16.msra.mxu0 0
    %94 = vmatprep.subr.bf16.mxu0 0
    %95 = vmatpush1.bf16.msra.mxu0 0
    %96 = vmatprep.subr.bf16.mxu0 0
    %97 = vmatpush1.bf16.msra.mxu0 0
    %98 = vmatprep.subr.bf16.mxu0 0
    %99 = vmatpush1.bf16.msra.mxu0 0
    %100 = vmatprep.subr.bf16.mxu0 0
    %101 = vmatpush1.bf16.msra.mxu0 0
    %102 = vmatprep.subr.bf16.mxu0 0
    %103 = vmatpush1.bf16.msra.mxu0 0
    %104 = vmatprep.subr.bf16.mxu0 0
    %105 = vmatpush1.bf16.msra.mxu0 0
    %106 = vmatprep.subr.bf16.mxu0 0
    %107 = vmatpush1.bf16.msra.mxu0 0
    %108 = vmatprep.subr.bf16.mxu0 0
    %109 = vmatpush1.bf16.msra.mxu0 0
    %110 = vmatprep.subr.bf16.mxu0 0
    %111 = vmatpush1.bf16.msra.mxu0 0
    %112 = vmatprep.subr.bf16.mxu0 0
    %113 = vmatpush1.bf16.msra.mxu0 0
    %114 = vmatprep.mubr.bf16.mxu0 0
    %115 = vmatmul.mubr.bf16.gmra.mrb[0].mxu0 %v80
    %v116 = vpop.f32.mrb[0].mxu0
    %v117 = vadd.f32 %v70, %v116
    %v118 = vpop.f32.mrb[0].mxu0
    %v119 = vpop.f32.mrb[0].mxu0
    %v120 = vpop.f32.mrb[0].mxu0
    %121 = vdwg.mxu0
    %v122 = vmax.f32 %v117, 0.0
    %v123 = vpack.c.bf16 %v122, %v122
    %v128 = vunpack.c.l.b16 %v44
    %v129 = vunpack.c.l.b16 %v45
    %v130 = vunpack.c.l.b16 %v46
    %v131 = vunpack.c.l.b16 %v47
    %v132 = vpack.c.b16 %v129, %v128
    %v133 = vpack.c.b16 %v131, %v130
    %vm136 = vcmask 261120
    %v138 = vsel %vm136, %v123, 0
    %140 = vmatprep.subr.bf16.mxu0 0
    %141 = vmatpush1.bf16.msra.mxu0 %v132
    %142 = vmatprep.subr.bf16.mxu0 0
    %143 = vmatpush1.bf16.msra.mxu0 %v133
    %144 = vmatprep.subr.bf16.mxu0 0
    %145 = vmatpush1.bf16.msra.mxu0 0
    %146 = vmatprep.subr.bf16.mxu0 0
    %147 = vmatpush1.bf16.msra.mxu0 0
    %148 = vmatprep.subr.bf16.mxu0 0
    %149 = vmatpush1.bf16.msra.mxu0 0
    %150 = vmatprep.subr.bf16.mxu0 0
    %151 = vmatpush1.bf16.msra.mxu0 0
    %152 = vmatprep.subr.bf16.mxu0 0
    %153 = vmatpush1.bf16.msra.mxu0 0
    %154 = vmatprep.subr.bf16.mxu0 0
    %155 = vmatpush1.bf16.msra.mxu0 0
    %156 = vmatprep.subr.bf16.mxu0 0
    %157 = vmatpush1.bf16.msra.mxu0 0
    %158 = vmatprep.subr.bf16.mxu0 0
    %159 = vmatpush1.bf16.msra.mxu0 0
    %160 = vmatprep.subr.bf16.mxu0 0
    %161 = vmatpush1.bf16.msra.mxu0 0
    %162 = vmatprep.subr.bf16.mxu0 0
    %163 = vmatpush1.bf16.msra.mxu0 0
    %164 = vmatprep.subr.bf16.mxu0 0
    %165 = vmatpush1.bf16.msra.mxu0 0
    %166 = vmatprep.subr.bf16.mxu0 0
    %167 = vmatpush1.bf16.msra.mxu0 0
    %168 = vmatprep.subr.bf16.mxu0 0
    %169 = vmatpush1.bf16.msra.mxu0 0
    %170 = vmatprep.subr.bf16.mxu0 0
    %171 = vmatpush1.bf16.msra.mxu0 0
    %172 = vmatprep.mubr.bf16.mxu0 0
    %173 = vmatmul.mubr.bf16.gmra.mrb[0].mxu0 %v138
    %v174 = vpop.f32.mrb[0].mxu0
    %v175 = vadd.f32 %v62, %v174
    %v176 = vpop.f32.mrb[0].mxu0
    %v177 = vpop.f32.mrb[0].mxu0
    %v178 = vpop.f32.mrb[0].mxu0
    %179 = vdwg.mxu0
    %v180 = vmax.f32 %v175, 0.0
    %v181 = vpack.c.bf16 %v180, %v180
    %v183 = vsel %vm136, %v181, 0
    %185 = vmatprep.subr.bf16.mxu0 0
    %186 = vmatpush1.bf16.msra.mxu0 %v132
    %187 = vmatprep.subr.bf16.mxu0 0
    %188 = vmatpush1.bf16.msra.mxu0 %v133
    %189 = vmatprep.subr.bf16.mxu0 0
    %190 = vmatpush1.bf16.msra.mxu0 0
    %191 = vmatprep.subr.bf16.mxu0 0
    %192 = vmatpush1.bf16.msra.mxu0 0
    %193 = vmatprep.subr.bf16.mxu0 0
    %194 = vmatpush1.bf16.msra.mxu0 0
    %195 = vmatprep.subr.bf16.mxu0 0
    %196 = vmatpush1.bf16.msra.mxu0 0
    %197 = vmatprep.subr.bf16.mxu0 0
    %198 = vmatpush1.bf16.msra.mxu0 0
    %199 = vmatprep.subr.bf16.mxu0 0
    %200 = vmatpush1.bf16.msra.mxu0 0
    %201 = vmatprep.subr.bf16.mxu0 0
    %202 = vmatpush1.bf16.msra.mxu0 0
    %203 = vmatprep.subr.bf16.mxu0 0
    %204 = vmatpush1.bf16.msra.mxu0 0
    %205 = vmatprep.subr.bf16.mxu0 0
    %206 = vmatpush1.bf16.msra.mxu0 0
    %207 = vmatprep.subr.bf16.mxu0 0
    %208 = vmatpush1.bf16.msra.mxu0 0
    %209 = vmatprep.subr.bf16.mxu0 0
    %210 = vmatpush1.bf16.msra.mxu0 0
    %211 = vmatprep.subr.bf16.mxu0 0
    %212 = vmatpush1.bf16.msra.mxu0 0
    %213 = vmatprep.subr.bf16.mxu0 0
    %214 = vmatpush1.bf16.msra.mxu0 0
    %215 = vmatprep.subr.bf16.mxu0 0
    %216 = vmatpush1.bf16.msra.mxu0 0
    %217 = vmatprep.mubr.bf16.mxu0 0
    %218 = vmatmul.mubr.bf16.gmra.mrb[0].mxu0 %v183
    %v219 = vpop.f32.mrb[0].mxu0
    %v220 = vadd.f32 %v62, %v219
    %v221 = vpop.f32.mrb[0].mxu0
    %v222 = vpop.f32.mrb[0].mxu0
    %v223 = vpop.f32.mrb[0].mxu0
    %224 = vdwg.mxu0
    %v225 = vpack.c.bf16 %v220, %v220
    %v227 = vlaneseq
    %v228 = vshrl.u32 %v227, 7
    %v229 = vsub.s32 0, %v228
    %v230 = vrot.slane %v55, %v229
    %v236 = vunpack.c.l.b16 %v49
    %v237 = vunpack.c.l.b16 %v50
    %v238 = vunpack.c.l.b16 %v51
    %v239 = vunpack.c.l.b16 %v52
    %v240 = vpack.c.b16 %v237, %v236
    %v241 = vpack.c.b16 %v239, %v238
    %v245 = vsel %vm136, %v225, 0
    %247 = vmatprep.subr.bf16.mxu0 0
    %248 = vmatpush1.bf16.msra.mxu0 %v240
    %249 = vmatprep.subr.bf16.mxu0 0
    %250 = vmatpush1.bf16.msra.mxu0 %v241
    %251 = vmatprep.subr.bf16.mxu0 0
    %252 = vmatpush1.bf16.msra.mxu0 0
    %253 = vmatprep.subr.bf16.mxu0 0
    %254 = vmatpush1.bf16.msra.mxu0 0
    %255 = vmatprep.subr.bf16.mxu0 0
    %256 = vmatpush1.bf16.msra.mxu0 0
    %257 = vmatprep.subr.bf16.mxu0 0
    %258 = vmatpush1.bf16.msra.mxu0 0
    %259 = vmatprep.subr.bf16.mxu0 0
    %260 = vmatpush1.bf16.msra.mxu0 0
    %261 = vmatprep.subr.bf16.mxu0 0
    %262 = vmatpush1.bf16.msra.mxu0 0
    %263 = vmatprep.subr.bf16.mxu0 0
    %264 = vmatpush1.bf16.msra.mxu0 0
    %265 = vmatprep.subr.bf16.mxu0 0
    %266 = vmatpush1.bf16.msra.mxu0 0
    %267 = vmatprep.subr.bf16.mxu0 0
    %268 = vmatpush1.bf16.msra.mxu0 0
    %269 = vmatprep.subr.bf16.mxu0 0
    %270 = vmatpush1.bf16.msra.mxu0 0
    %271 = vmatprep.subr.bf16.mxu0 0
    %272 = vmatpush1.bf16.msra.mxu0 0
    %273 = vmatprep.subr.bf16.mxu0 0
    %274 = vmatpush1.bf16.msra.mxu0 0
    %275 = vmatprep.subr.bf16.mxu0 0
    %276 = vmatpush1.bf16.msra.mxu0 0
    %277 = vmatprep.subr.bf16.mxu0 0
    %278 = vmatpush1.bf16.msra.mxu0 0
    %279 = vmatprep.mubr.bf16.mxu0 0
    %280 = vmatmul.mubr.bf16.gmra.mrb[0].mxu0 %v245
    %v281 = vpop.f32.mrb[0].mxu0
    %v282 = vadd.f32 %v230, %v281
    %v283 = vpop.f32.mrb[0].mxu0
    %v284 = vpop.f32.mrb[0].mxu0
    %v285 = vpop.f32.mrb[0].mxu0
    %286 = vdwg.mxu0
    %vm287 = vcmask 31744
    %v288 = vsel %vm287, %v282, -inf
    %289 = vmax.xlane.f32.xlu0 %v288
    %v290 = vpop.xlane.xlu0 %289
    %v291 = vsub.f32 %v282, %v290
    %v292 = vmul.f32 %v291, 1.442695
    %v293 = vpow.pop %v292
    %v294 = vsel %vm287, %v293, 0.0
    %295 = vadd.xlane.f32.xlu0 %v294
    %v296 = vpop.xlane.xlu0 %295
    %v297 = vrcp.pop %v296
    %v298 = vmul.f32 %v293, %v297
    %299 = vst.msk [vmem:[%s3] sm:$0xff] %vm287, %v298
    // Predicated region
    $region22: #{tpu_custom_call.1} parent=1 // pred_check
      _
    $region23: #{tpu_custom_call.1} parent=1 // pred_check_branch
      %301 = sbr.rel (0) target = $region25
    $region24: #{tpu_custom_call.1} parent=1 // pred_region
      _
    $region25: #{tpu_custom_call.1} parent=1 // pred_fallthru
      _
    // Predicated region
    $region26: #{tpu_custom_call.1} parent=1 // pred_check
      _
    $region27: #{tpu_custom_call.1} parent=1 // pred_check_branch
      %303 = sbr.rel (0) target = $region29
    $region28: #{tpu_custom_call.1} parent=1 // pred_region
      _
    $region29: #{tpu_custom_call.1} parent=1 // pred_fallthru
      _
    %304 = vsyncpa [#allocation3], 1
    %305 = vsyncpa [#allocation5], 1

</llo_original>
